<compile_context>
chip_gen: v6e
topology: v6e:2x2x1
jax: 0.10.0
libtpu: 0.0.40
codegen_flags: <defaults>
</compile_context>

<pallas_src>
import jax
import jax.numpy as jnp
from jax.experimental import pallas as pl
from jax.experimental.pallas import tpu as pltpu

IN_DIM = 44
HID_DIM = 10
OUT_DIM = 1


def _round_up(n: int, m: int) -> int:
    return ((n + m - 1) // m) * m


def _mlp_kernel(x_ref, w1_ref, b1_ref, w2_ref, b2_ref, w3_ref, b3_ref, o_ref):
    # x_ref: (bt, 44) tile of the batch.  Upcast is a no-op for f32 inputs and makes
    # bf16 inputs safe on v5e (no bf16 VPU there).
    x = x_ref[...].astype(jnp.float32)

    # lin1 + ReLU : (bt, 44) @ (44, 10) + (1, 10)
    h1 = jnp.dot(x, w1_ref[...], preferred_element_type=jnp.float32) + b1_ref[...]
    h1 = jnp.maximum(h1, 0.0)

    # lin2 + ReLU : (bt, 10) @ (10, 10) + (1, 10)
    h2 = jnp.dot(h1, w2_ref[...], preferred_element_type=jnp.float32) + b2_ref[...]
    h2 = jnp.maximum(h2, 0.0)

    # lin3, emitted lane-major: (1, 10) contracted with (bt, 10) on dim 1 -> (1, bt).
    # This makes the output row lane-dense (unmasked vst) instead of a (bt, 1) column.
    y = jax.lax.dot_general(
        w3_ref[...], h2,
        dimension_numbers=(((1,), (1,)), ((), ())),
        preferred_element_type=jnp.float32,
    ) + b3_ref[...]                      # (1, bt) + (1, 1) broadcast

    o_ref[...] = y.reshape(o_ref.shape).astype(o_ref.dtype)   # (1, 1, bt)


def downstream_model(x, params, *, batch_tile: int = 1024):
    """x: (B, 44) float32 or bfloat16.  Returns (B, 1) float32."""
    w1, b1, w2, b2, w3, b3 = params
    B, F = x.shape
    assert F == IN_DIM

    # Adaptive tile: small batches become a single block; otherwise 1024-row tiles
    # (~180 KB each, trivially within VMEM on v5e/v6e/v7x, long grid for megacore).
    bt = min(batch_tile, max(8, _round_up(B, 8)))
    bt = _round_up(bt, 8)
    Bp = _round_up(B, bt)
    if Bp != B:
        x = jnp.pad(x, ((0, Bp - B), (0, 0)))   # zero-pad ragged tail; sliced off below
    n_tiles = Bp // bt

    # Final-layer weight as a (1, 10) row (PyTorch (out, in) layout) for the lane-dense dot.
    w3_row = jnp.reshape(w3, (1, HID_DIM))

    full2 = lambda i: (0, 0)   # weights/biases: constant block -> no re-DMA across steps

    weight_bytes = 4 * (IN_DIM * HID_DIM + HID_DIM + HID_DIM * HID_DIM + HID_DIM
                        + HID_DIM * OUT_DIM + OUT_DIM)
    cost = pl.CostEstimate(
        flops=2 * Bp * (IN_DIM * HID_DIM + HID_DIM * HID_DIM + HID_DIM * OUT_DIM),
        transcendentals=0,
        bytes_accessed=Bp * IN_DIM * x.dtype.itemsize + Bp * 4 + weight_bytes,
    )

    out = pl.pallas_call(
        _mlp_kernel,
        out_shape=jax.ShapeDtypeStruct((n_tiles, 1, bt), jnp.float32),
        grid_spec=pltpu.PrefetchScalarGridSpec(
            num_scalar_prefetch=0,
            grid=(n_tiles,),
            in_specs=[
                pl.BlockSpec((bt, IN_DIM), lambda i: (i, 0)),    # x tile
                pl.BlockSpec((IN_DIM, HID_DIM), full2),          # w1 (44, 10)
                pl.BlockSpec((1, HID_DIM), full2),               # b1 (1, 10)
                pl.BlockSpec((HID_DIM, HID_DIM), full2),         # w2 (10, 10)
                pl.BlockSpec((1, HID_DIM), full2),               # b2 (1, 10)
                pl.BlockSpec((1, HID_DIM), full2),               # w3 row (1, 10)
                pl.BlockSpec((1, OUT_DIM), full2),               # b3 (1, 1)
            ],
            out_specs=pl.BlockSpec((1, 1, bt), lambda i: (i, 0, 0)),
        ),
        compiler_params=pltpu.CompilerParams(
            dimension_semantics=("parallel",),   # megacore sharding on v7x
        ),
        cost_estimate=cost,
    )(x, w1, b1, w2, b2, w3_row, b3)

    # (n_tiles, 1, bt) -> (B, 1), dropping padded rows.
    return out.reshape(-1)[:B].reshape(B, OUT_DIM)


def init_params(key):
    """Deterministic init mimicking torch.nn.Linear's U(-1/sqrt(fan_in), 1/sqrt(fan_in))."""
    def linear_init(k, fan_in, fan_out):
        kw, kb = jax.random.split(k)
        bound = 1.0 / jnp.sqrt(fan_in)
        w = jax.random.uniform(kw, (fan_in, fan_out), jnp.float32, -bound, bound)
        b = jax.random.uniform(kb, (1, fan_out), jnp.float32, -bound, bound)
        return w, b

    k1, k2, k3 = jax.random.split(key, 3)
    w1, b1 = linear_init(k1, IN_DIM, HID_DIM)
    w2, b2 = linear_init(k2, HID_DIM, HID_DIM)
    w3, b3 = linear_init(k3, HID_DIM, OUT_DIM)
    return (w1, b1, w2, b2, w3, b3)


def reference(x, params):
    w1, b1, w2, b2, w3, b3 = params
    h1 = jnp.maximum(x @ w1 + b1, 0.0)
    h2 = jnp.maximum(h1 @ w2 + b2, 0.0)
    return h2 @ w3 + b3


if __name__ == "__main__":
    key = jax.random.PRNGKey(0)
    k_params, k_x = jax.random.split(key)
    params = init_params(k_params)

    # Case 1: tiny batch -> single grid step, whole batch as one block.
    x_small = jax.random.normal(k_x, (16, IN_DIM), jnp.float32)
    out_small = jax.block_until_ready(downstream_model(x_small, params))
    assert out_small.shape == (16, 1), out_small.shape
    assert jnp.allclose(out_small, reference(x_small, params), atol=1e-4, rtol=1e-4)

    # Case 2: larger ragged batch -> multi-tile grid (1024-row tiles) + tail padding.
    x_big = jax.random.normal(jax.random.PRNGKey(1), (2500, IN_DIM), jnp.float32)
    out_big = jax.block_until_ready(downstream_model(x_big, params))
    assert out_big.shape == (2500, 1), out_big.shape
    assert jnp.allclose(out_big, reference(x_big, params), atol=1e-4, rtol=1e-4)

    # Case 3: bf16 activations in HBM (halves x traffic); kernel upcasts to f32.
    x_bf16 = x_big.astype(jnp.bfloat16)
    out_bf16 = jax.block_until_ready(downstream_model(x_bf16, params))
    ref_bf16 = reference(x_bf16.astype(jnp.float32), params)
    assert out_bf16.shape == (2500, 1), out_bf16.shape
    assert jnp.allclose(out_bf16, ref_bf16, atol=1e-4, rtol=1e-4)

    print("KERNEL_OK")
</pallas_src>

<mosaic_0001>
module attributes {stable_mosaic.version = 11 : i64} {
  func.func @_mlp_kernel(%arg0: i32, %arg1: memref<16x44xf32, #tpu.memory_space<vmem>>, %arg2: memref<44x10xf32, #tpu.memory_space<vmem>>, %arg3: memref<1x10xf32, #tpu.memory_space<vmem>>, %arg4: memref<10x10xf32, #tpu.memory_space<vmem>>, %arg5: memref<1x10xf32, #tpu.memory_space<vmem>>, %arg6: memref<1x10xf32, #tpu.memory_space<vmem>>, %arg7: memref<1x1xf32, #tpu.memory_space<vmem>>, %arg8: memref<1x1x16xf32, #tpu.memory_space<vmem>>) attributes {dimension_semantics = [#tpu.dimension_semantics<parallel>], iteration_bounds = array<i64: 1>, scalar_prefetch = 0 : i64, scratch_operands = 0 : i64, tpu.core_type = #tpu.core_type<tc>, window_params = [{transform_indices = @transform_0, window_bounds = array<i64: 16, 44>}, {pipeline_mode = #tpu.pipeline_mode<synchronous>, transform_indices = @transform_1, window_bounds = array<i64: 44, 10>}, {pipeline_mode = #tpu.pipeline_mode<synchronous>, transform_indices = @transform_2, window_bounds = array<i64: 1, 10>}, {pipeline_mode = #tpu.pipeline_mode<synchronous>, transform_indices = @transform_3, window_bounds = array<i64: 10, 10>}, {pipeline_mode = #tpu.pipeline_mode<synchronous>, transform_indices = @transform_4, window_bounds = array<i64: 1, 10>}, {pipeline_mode = #tpu.pipeline_mode<synchronous>, transform_indices = @transform_5, window_bounds = array<i64: 1, 10>}, {pipeline_mode = #tpu.pipeline_mode<synchronous>, transform_indices = @transform_6, window_bounds = array<i64: 1, 1>}, {transform_indices = @transform_7, window_bounds = array<i64: 1, 1, 16>}]} {
    %c0 = arith.constant 0 : index
    %c0_0 = arith.constant 0 : index
    %0 = vector.load %arg1[%c0, %c0_0] : memref<16x44xf32, #tpu.memory_space<vmem>>, vector<16x44xf32>
    %c0_1 = arith.constant 0 : index
    %c0_2 = arith.constant 0 : index
    %1 = vector.load %arg2[%c0_1, %c0_2] : memref<44x10xf32, #tpu.memory_space<vmem>>, vector<44x10xf32>
    %cst = arith.constant dense<0.000000e+00> : vector<16x10xf32>
    %2 = tpu.matmul %0, %1, %cst {dimension_numbers = #tpu.dot_dimension_numbers<[1], [0], [0], [1], [0, 0, 1, 1], [], []>} : vector<16x44xf32>, vector<44x10xf32>, vector<16x10xf32> -> vector<16x10xf32>
    %c0_3 = arith.constant 0 : index
    %c0_4 = arith.constant 0 : index
    %3 = vector.load %arg3[%c0_3, %c0_4] : memref<1x10xf32, #tpu.memory_space<vmem>>, vector<1x10xf32>
    %4 = vector.broadcast %3 : vector<1x10xf32> to vector<16x10xf32>
    %5 = arith.addf %2, %4 : vector<16x10xf32>
    %cst_5 = arith.constant 0.000000e+00 : f32
    %6 = vector.broadcast %cst_5 : f32 to vector<16x10xf32>
    %7 = arith.maximumf %5, %6 : vector<16x10xf32>
    %c0_6 = arith.constant 0 : index
    %c0_7 = arith.constant 0 : index
    %8 = vector.load %arg4[%c0_6, %c0_7] : memref<10x10xf32, #tpu.memory_space<vmem>>, vector<10x10xf32>
    %cst_8 = arith.constant dense<0.000000e+00> : vector<16x10xf32>
    %9 = tpu.matmul %7, %8, %cst_8 {dimension_numbers = #tpu.dot_dimension_numbers<[1], [0], [0], [1], [0, 0, 1, 1], [], []>} : vector<16x10xf32>, vector<10x10xf32>, vector<16x10xf32> -> vector<16x10xf32>
    %c0_9 = arith.constant 0 : index
    %c0_10 = arith.constant 0 : index
    %10 = vector.load %arg5[%c0_9, %c0_10] : memref<1x10xf32, #tpu.memory_space<vmem>>, vector<1x10xf32>
    %11 = vector.broadcast %10 : vector<1x10xf32> to vector<16x10xf32>
    %12 = arith.addf %9, %11 : vector<16x10xf32>
    %cst_11 = arith.constant 0.000000e+00 : f32
    %13 = vector.broadcast %cst_11 : f32 to vector<16x10xf32>
    %14 = arith.maximumf %12, %13 : vector<16x10xf32>
    %c0_12 = arith.constant 0 : index
    %c0_13 = arith.constant 0 : index
    %15 = vector.load %arg6[%c0_12, %c0_13] : memref<1x10xf32, #tpu.memory_space<vmem>>, vector<1x10xf32>
    %cst_14 = arith.constant dense<0.000000e+00> : vector<1x16xf32>
    %16 = tpu.matmul %15, %14, %cst_14 {dimension_numbers = #tpu.dot_dimension_numbers<[1], [1], [0], [0], [0, 0, 1, 0], [], []>} : vector<1x10xf32>, vector<16x10xf32>, vector<1x16xf32> -> vector<1x16xf32>
    %c0_15 = arith.constant 0 : index
    %c0_16 = arith.constant 0 : index
    %17 = vector.load %arg7[%c0_15, %c0_16] : memref<1x1xf32, #tpu.memory_space<vmem>>, vector<1x1xf32>
    %18 = vector.broadcast %17 : vector<1x1xf32> to vector<1x16xf32>
    %19 = arith.addf %16, %18 : vector<1x16xf32>
    %20 = vector.shape_cast %19 : vector<1x16xf32> to vector<1x1x16xf32>
    %c0_17 = arith.constant 0 : index
    %c0_18 = arith.constant 0 : index
    %c0_19 = arith.constant 0 : index
    %21 = vector.load %arg8[%c0_17, %c0_18, %c0_19] : memref<1x1x16xf32, #tpu.memory_space<vmem>>, vector<1x1x16xf32>
    tpu.vector_store %arg8[%c0_17, %c0_18, %c0_19], %20 {strides = array<i32>} : memref<1x1x16xf32, #tpu.memory_space<vmem>>, vector<1x1x16xf32>,
    return
  }
  func.func @transform_0(%arg0: i32) -> (i32, i32) {
    %c0_i32 = arith.constant 0 : i32
    %c0_i32_0 = arith.constant 0 : i32
    return %arg0, %c0_i32 : i32, i32
  }
  func.func @transform_1(%arg0: i32) -> (i32, i32) {
    %c0_i32 = arith.constant 0 : i32
    %c0_i32_0 = arith.constant 0 : i32
    %c0_i32_1 = arith.constant 0 : i32
    return %c0_i32, %c0_i32_0 : i32, i32
  }
  func.func @transform_2(%arg0: i32) -> (i32, i32) {
    %c0_i32 = arith.constant 0 : i32
    %c0_i32_0 = arith.constant 0 : i32
    %c0_i32_1 = arith.constant 0 : i32
    return %c0_i32, %c0_i32_0 : i32, i32
  }
  func.func @transform_3(%arg0: i32) -> (i32, i32) {
    %c0_i32 = arith.constant 0 : i32
    %c0_i32_0 = arith.constant 0 : i32
    %c0_i32_1 = arith.constant 0 : i32
    return %c0_i32, %c0_i32_0 : i32, i32
  }
  func.func @transform_4(%arg0: i32) -> (i32, i32) {
    %c0_i32 = arith.constant 0 : i32
    %c0_i32_0 = arith.constant 0 : i32
    %c0_i32_1 = arith.constant 0 : i32
    return %c0_i32, %c0_i32_0 : i32, i32
  }
  func.func @transform_5(%arg0: i32) -> (i32, i32) {
    %c0_i32 = arith.constant 0 : i32
    %c0_i32_0 = arith.constant 0 : i32
    %c0_i32_1 = arith.constant 0 : i32
    return %c0_i32, %c0_i32_0 : i32, i32
  }
  func.func @transform_6(%arg0: i32) -> (i32, i32) {
    %c0_i32 = arith.constant 0 : i32
    %c0_i32_0 = arith.constant 0 : i32
    %c0_i32_1 = arith.constant 0 : i32
    return %c0_i32, %c0_i32_0 : i32, i32
  }
  func.func @transform_7(%arg0: i32) -> (i32, i32, i32) {
    %c0_i32 = arith.constant 0 : i32
    %c0_i32_0 = arith.constant 0 : i32
    %c0_i32_1 = arith.constant 0 : i32
    return %arg0, %c0_i32, %c0_i32_0 : i32, i32, i32
  }
}

</mosaic_0001>

<llo_original>
// kernel: tpu_custom_call.1
$region0: #{tpu_custom_call.1}
  #allocation0 [shape = 'u32[]', space=smem, size = 0x4, offset = 0x4, fixed_abs, tag = 'smem constant byte address 0x4 - core index']
  #allocation1 [shape = 'u32[144,128]{1,0:T(1,128)}', space=vmem, size = 0x12000, scoped, tag = 'internal scratch']
  #allocation2 [shape = 'f32[1,1]{1,0:T(1,128)S(1)}', space=vmem, size = 0x200, scoped, tag = 'scoped memory for tpu_custom_call.1']
  %s0 = inlined_call_operand.vmem [shape: f32[16,44], index: 0, kind: input, shape index: {}]
  %s1 = inlined_call_operand.vmem [shape: f32[44,10], index: 1, kind: input, shape index: {}]
  %s2 = inlined_call_operand.vmem [shape: f32[1,10], index: 2, kind: input, shape index: {}]
  %s3 = inlined_call_operand.vmem [shape: f32[10,10], index: 3, kind: input, shape index: {}]
  %s4 = inlined_call_operand.vmem [shape: f32[1,10], index: 4, kind: input, shape index: {}]
  %s5 = inlined_call_operand.vmem [shape: f32[1,10], index: 5, kind: input, shape index: {}]
  %s6 = inlined_call_operand.<no memory space> [shape: f32[1,1], index: 6, kind: input, shape index: {}]
  %s7 = inlined_call_operand.hbm [shape: f32[1,1,16], index: 7, kind: output, shape index: {}]
  %s8 = sld [smem:[#allocation0]]
  $region38: #{tpu_custom_call.1} parent=0
    _
  %s10 = ssub.s32 1, %s8
  %s11 = scalar_select 0, %s10, %s8
  %v12 = vstv %s6
  %13 = vst [vmem:[#allocation2] sm:$0x1] %v12
  $region1: #{tpu_custom_call.1} parent=0
    #allocation3 [shape = 'u8[512]{0}', space=vmem, size = 0x400, scoped, tag = 'output window, operand 0, single buffered']
    #allocation4 [shape = 's32[1]{0}', space=sflag, size = 0x4, scoped, tag = 'scoped memory for tpu_custom_call.1']
    %14 = vsyncpa [#allocation4], 0
    // Predicated region
    $region2: #{tpu_custom_call.1} parent=1 // pred_check
      _
    $region3: #{tpu_custom_call.1} parent=1 // pred_check_branch
      %16 = sbr.rel (0) target = $region5
    $region4: #{tpu_custom_call.1} parent=1 // pred_region
      _
    $region5: #{tpu_custom_call.1} parent=1 // pred_fallthru
      _
    // Predicated region
    $region6: #{tpu_custom_call.1} parent=1 // pred_check
      _
    $region7: #{tpu_custom_call.1} parent=1 // pred_check_branch
      %18 = sbr.rel (0) target = $region9
    $region8: #{tpu_custom_call.1} parent=1 // pred_region
      _
    $region9: #{tpu_custom_call.1} parent=1 // pred_fallthru
      _
    // Predicated region
    $region10: #{tpu_custom_call.1} parent=1 // pred_check
      _
    $region11: #{tpu_custom_call.1} parent=1 // pred_check_branch
      %20 = sbr.rel (0) target = $region13
    $region12: #{tpu_custom_call.1} parent=1 // pred_region
      _
    $region13: #{tpu_custom_call.1} parent=1 // pred_fallthru
      _
    // Predicated region
    $region14: #{tpu_custom_call.1} parent=1 // pred_check
      _
    $region15: #{tpu_custom_call.1} parent=1 // pred_check_branch
      %22 = sbr.rel (0) target = $region17
    $region16: #{tpu_custom_call.1} parent=1 // pred_region
      _
    $region17: #{tpu_custom_call.1} parent=1 // pred_fallthru
      _
    // Predicated region
    $region18: #{tpu_custom_call.1} parent=1 // pred_check
      _
    $region19: #{tpu_custom_call.1} parent=1 // pred_check_branch
      %24 = sbr.rel (0) target = $region21
    $region20: #{tpu_custom_call.1} parent=1 // pred_region
      _
    $region21: #{tpu_custom_call.1} parent=1 // pred_fallthru
      _
    // Predicated region
    $region22: #{tpu_custom_call.1} parent=1 // pred_check
      _
    $region23: #{tpu_custom_call.1} parent=1 // pred_check_branch
      %26 = sbr.rel (0) target = $region25
    $region24: #{tpu_custom_call.1} parent=1 // pred_region
      _
    $region25: #{tpu_custom_call.1} parent=1 // pred_fallthru
      _
    // Predicated region
    $region26: #{tpu_custom_call.1} parent=1 // pred_check
      _
    $region27: #{tpu_custom_call.1} parent=1 // pred_check_branch
      %28 = sbr.rel (0) target = $region29
    $region28: #{tpu_custom_call.1} parent=1 // pred_region
      _
    $region29: #{tpu_custom_call.1} parent=1 // pred_fallthru
      _
    %v29 = vld [vmem:[%s0] sm:$0xff]
    %v30 = vld [vmem:[%s0 + $0x8] sm:$0xff]
    %v31 = vld [vmem:[%s1] sm:$0xff]
    %v32 = vld [vmem:[%s1 + $0x8] sm:$0xff]
    %v33 = vld [vmem:[%s1 + $0x10] sm:$0xff]
    %v34 = vld [vmem:[%s1 + $0x18] sm:$0xff]
    %v35 = vld [vmem:[%s1 + $0x20] sm:$0xff]
    %v36 = vld [vmem:[%s1 + $0x28] sm:$0xf]
    %v37 = vld [vmem:[%s2] sm:$0x1]
    %v39 = vlaneseq
    %v40 = vshrl.u32 %v39, 7
    %v41 = vsub.s32 0, %v40
    %v42 = vrot.slane %v37, %v41
    %vm44 = vcmask 359424
    %v46 = vsel %vm44, %v29, 0
    %v49 = vsel %vm44, %v30, 0
    %vm51 = vcmask 1043456
    %v53 = vsel %vm51, %v36, 0
    %55 = vmatprep.subr.mxu0 0.0
    %56 = vmatpush1.msra.mxu0 0.0
    %57 = vmatprep.subr.mxu0 0.0
    %58 = vmatpush1.msra.mxu0 0.0
    %59 = vmatprep.subr.mxu0 0.0
    %60 = vmatpush1.msra.mxu0 0.0
    %61 = vmatprep.subr.mxu0 0.0
    %62 = vmatpush1.msra.mxu0 0.0
    %63 = vmatprep.subr.mxu0 0.0
    %64 = vmatpush1.msra.mxu0 0.0
    %65 = vmatprep.subr.mxu0 0.0
    %66 = vmatpush1.msra.mxu0 0.0
    %67 = vmatprep.subr.mxu0 0.0
    %68 = vmatpush1.msra.mxu0 0.0
    %69 = vmatprep.subr.mxu0 0.0
    %70 = vmatpush1.msra.mxu0 0.0
    %71 = vmatprep.subr.mxu0 0.0
    %72 = vmatpush1.msra.mxu0 0.0
    %73 = vmatprep.subr.mxu0 0.0
    %74 = vmatpush1.msra.mxu0 0.0
    %75 = vmatprep.subr.mxu0 0.0
    %76 = vmatpush1.msra.mxu0 %v53
    %77 = vmatprep.subr.mxu0 0.0
    %78 = vmatpush1.msra.mxu0 %v35
    %79 = vmatprep.subr.mxu0 0.0
    %80 = vmatpush1.msra.mxu0 %v34
    %81 = vmatprep.subr.mxu0 0.0
    %82 = vmatpush1.msra.mxu0 %v33
    %83 = vmatprep.subr.mxu0 0.0
    %84 = vmatpush1.msra.mxu0 %v32
    %85 = vmatprep.subr.mxu0 0.0
    %86 = vmatpush1.msra.mxu0 %v31
    %87 = vmatprep.subr.mxu0 0.0
    %88 = vmatpush2.msra.mxu0 0.0
    %89 = vmatprep.subr.mxu0 0.0
    %90 = vmatpush2.msra.mxu0 0.0
    %91 = vmatprep.subr.mxu0 0.0
    %92 = vmatpush2.msra.mxu0 0.0
    %93 = vmatprep.subr.mxu0 0.0
    %94 = vmatpush2.msra.mxu0 0.0
    %95 = vmatprep.subr.mxu0 0.0
    %96 = vmatpush2.msra.mxu0 0.0
    %97 = vmatprep.subr.mxu0 0.0
    %98 = vmatpush2.msra.mxu0 0.0
    %99 = vmatprep.subr.mxu0 0.0
    %100 = vmatpush2.msra.mxu0 0.0
    %101 = vmatprep.subr.mxu0 0.0
    %102 = vmatpush2.msra.mxu0 0.0
    %103 = vmatprep.subr.mxu0 0.0
    %104 = vmatpush2.msra.mxu0 0.0
    %105 = vmatprep.subr.mxu0 0.0
    %106 = vmatpush2.msra.mxu0 0.0
    %107 = vmatprep.subr.mxu0 0.0
    %108 = vmatpush2.msra.mxu0 0.0
    %109 = vmatprep.subr.mxu0 0.0
    %110 = vmatpush2.msra.mxu0 0.0
    %111 = vmatprep.subr.mxu0 0.0
    %112 = vmatpush2.msra.mxu0 0.0
    %113 = vmatprep.subr.mxu0 0.0
    %114 = vmatpush2.msra.mxu0 0.0
    %115 = vmatprep.subr.mxu0 0.0
    %116 = vmatpush2.msra.mxu0 0.0
    %117 = vmatprep.subr.mxu0 0.0
    %118 = vmatpush2.msra.mxu0 0.0
    %119 = vmatprep.mubr.f32.mxu0 0.0
    %120 = vmatmul.mubr.f32.gmra.mxu0 %v46
    %v121 = vpop.f32.mrf.mxu0
    %v122 = vadd.f32 %v42, %v121
    %v123 = vpop.f32.mrf.mxu0
    %124 = vmatprep.mubr.f32.mxu0 0.0
    %125 = vmatmul.mubr.f32.gmra.mxu0 %v49
    %v126 = vpop.f32.mrf.mxu0
    %v127 = vadd.f32 %v42, %v126
    %v128 = vpop.f32.mrf.mxu0
    %129 = vdwg.mxu0
    %v130 = vmax.f32 %v122, 0.0
    %v131 = vmax.f32 %v127, 0.0
    %v132 = vld [vmem:[%s3] sm:$0xff]
    %v133 = vld [vmem:[%s3 + $0x8] sm:$0x3]
    %v134 = vld [vmem:[%s4] sm:$0x1]
    %v136 = vlaneseq
    %v137 = vshrl.u32 %v136, 7
    %v138 = vsub.s32 0, %v137
    %v139 = vrot.slane %v134, %v138
    %vm141 = vcmask 80896
    %v143 = vsel %vm141, %v130, 0
    %v146 = vsel %vm141, %v131, 0
    %vm148 = vcmask 1041408
    %v150 = vsel %vm148, %v133, 0
    %152 = vmatprep.subr.mxu0 0.0
    %153 = vmatpush1.msra.mxu0 0.0
    %154 = vmatprep.subr.mxu0 0.0
    %155 = vmatpush1.msra.mxu0 0.0
    %156 = vmatprep.subr.mxu0 0.0
    %157 = vmatpush1.msra.mxu0 0.0
    %158 = vmatprep.subr.mxu0 0.0
    %159 = vmatpush1.msra.mxu0 0.0
    %160 = vmatprep.subr.mxu0 0.0
    %161 = vmatpush1.msra.mxu0 0.0
    %162 = vmatprep.subr.mxu0 0.0
    %163 = vmatpush1.msra.mxu0 0.0
    %164 = vmatprep.subr.mxu0 0.0
    %165 = vmatpush1.msra.mxu0 0.0
    %166 = vmatprep.subr.mxu0 0.0
    %167 = vmatpush1.msra.mxu0 0.0
    %168 = vmatprep.subr.mxu0 0.0
    %169 = vmatpush1.msra.mxu0 0.0
    %170 = vmatprep.subr.mxu0 0.0
    %171 = vmatpush1.msra.mxu0 0.0
    %172 = vmatprep.subr.mxu0 0.0
    %173 = vmatpush1.msra.mxu0 0.0
    %174 = vmatprep.subr.mxu0 0.0
    %175 = vmatpush1.msra.mxu0 0.0
    %176 = vmatprep.subr.mxu0 0.0
    %177 = vmatpush1.msra.mxu0 0.0
    %178 = vmatprep.subr.mxu0 0.0
    %179 = vmatpush1.msra.mxu0 0.0
    %180 = vmatprep.subr.mxu0 0.0
    %181 = vmatpush1.msra.mxu0 %v150
    %182 = vmatprep.subr.mxu0 0.0
    %183 = vmatpush1.msra.mxu0 %v132
    %184 = vmatprep.subr.mxu0 0.0
    %185 = vmatpush2.msra.mxu0 0.0
    %186 = vmatprep.subr.mxu0 0.0
    %187 = vmatpush2.msra.mxu0 0.0
    %188 = vmatprep.subr.mxu0 0.0
    %189 = vmatpush2.msra.mxu0 0.0
    %190 = vmatprep.subr.mxu0 0.0
    %191 = vmatpush2.msra.mxu0 0.0
    %192 = vmatprep.subr.mxu0 0.0
    %193 = vmatpush2.msra.mxu0 0.0
    %194 = vmatprep.subr.mxu0 0.0
    %195 = vmatpush2.msra.mxu0 0.0
    %196 = vmatprep.subr.mxu0 0.0
    %197 = vmatpush2.msra.mxu0 0.0
    %198 = vmatprep.subr.mxu0 0.0
    %199 = vmatpush2.msra.mxu0 0.0
    %200 = vmatprep.subr.mxu0 0.0
    %201 = vmatpush2.msra.mxu0 0.0
    %202 = vmatprep.subr.mxu0 0.0
    %203 = vmatpush2.msra.mxu0 0.0
    %204 = vmatprep.subr.mxu0 0.0
    %205 = vmatpush2.msra.mxu0 0.0
    %206 = vmatprep.subr.mxu0 0.0
    %207 = vmatpush2.msra.mxu0 0.0
    %208 = vmatprep.subr.mxu0 0.0
    %209 = vmatpush2.msra.mxu0 0.0
    %210 = vmatprep.subr.mxu0 0.0
    %211 = vmatpush2.msra.mxu0 0.0
    %212 = vmatprep.subr.mxu0 0.0
    %213 = vmatpush2.msra.mxu0 0.0
    %214 = vmatprep.subr.mxu0 0.0
    %215 = vmatpush2.msra.mxu0 0.0
    %216 = vmatprep.mubr.f32.mxu0 0.0
    %217 = vmatmul.mubr.f32.gmra.mxu0 %v143
    %v218 = vpop.f32.mrf.mxu0
    %v219 = vadd.f32 %v139, %v218
    %v220 = vpop.f32.mrf.mxu0
    %221 = vmatprep.mubr.f32.mxu0 0.0
    %222 = vmatmul.mubr.f32.gmra.mxu0 %v146
    %v223 = vpop.f32.mrf.mxu0
    %v224 = vadd.f32 %v139, %v223
    %v225 = vpop.f32.mrf.mxu0
    %226 = vdwg.mxu0
    %v227 = vmax.f32 %v219, 0.0
    %v228 = vmax.f32 %v224, 0.0
    %v229 = vld [vmem:[%s5] sm:$0x1]
    %v230 = vld [vmem:[#allocation2] sm:$0x1]
    %232 = vset.pattern.permute.xlu0 0
    %233 = vperm.xlu0 %232, %v230
    %v234 = vpop.permute.xlu0 %233
    %v236 = vlaneseq
    %v237 = vshrl.u32 %v236, 7
    %v238 = vsub.s32 0, %v237
    %v239 = vrot.slane %v234, %v238
    %v241 = vsel %vm141, %v229, 0
    %v244 = vsel %vm141, %v227, 0
    %v247 = vsel %vm141, %v228, 0
    %249 = vmatprep.subr.mxu0 0.0
    %250 = vmatpush1.xpose.msra.mxu0 0.0
    %251 = vmatprep.subr.mxu0 0.0
    %252 = vmatpush1.xpose.msra.mxu0 0.0
    %253 = vmatprep.subr.mxu0 0.0
    %254 = vmatpush1.xpose.msra.mxu0 0.0
    %255 = vmatprep.subr.mxu0 0.0
    %256 = vmatpush1.xpose.msra.mxu0 0.0
    %257 = vmatprep.subr.mxu0 0.0
    %258 = vmatpush1.xpose.msra.mxu0 0.0
    %259 = vmatprep.subr.mxu0 0.0
    %260 = vmatpush1.xpose.msra.mxu0 0.0
    %261 = vmatprep.subr.mxu0 0.0
    %262 = vmatpush1.xpose.msra.mxu0 0.0
    %263 = vmatprep.subr.mxu0 0.0
    %264 = vmatpush1.xpose.msra.mxu0 0.0
    %265 = vmatprep.subr.mxu0 0.0
    %266 = vmatpush1.xpose.msra.mxu0 0.0
    %267 = vmatprep.subr.mxu0 0.0
    %268 = vmatpush1.xpose.msra.mxu0 0.0
    %269 = vmatprep.subr.mxu0 0.0
    %270 = vmatpush1.xpose.msra.mxu0 0.0
    %271 = vmatprep.subr.mxu0 0.0
    %272 = vmatpush1.xpose.msra.mxu0 0.0
    %273 = vmatprep.subr.mxu0 0.0
    %274 = vmatpush1.xpose.msra.mxu0 0.0
    %275 = vmatprep.subr.mxu0 0.0
    %276 = vmatpush1.xpose.msra.mxu0 0.0
    %277 = vmatprep.subr.mxu0 0.0
    %278 = vmatpush1.xpose.msra.mxu0 %v247
    %279 = vmatprep.subr.mxu0 0.0
    %280 = vmatpush1.xpose.msra.mxu0 %v244
    %281 = vmatprep.subr.mxu0 0.0
    %282 = vmatpush2.xpose.msra.mxu0 0.0
    %283 = vmatprep.subr.mxu0 0.0
    %284 = vmatpush2.xpose.msra.mxu0 0.0
    %285 = vmatprep.subr.mxu0 0.0
    %286 = vmatpush2.xpose.msra.mxu0 0.0
    %287 = vmatprep.subr.mxu0 0.0
    %288 = vmatpush2.xpose.msra.mxu0 0.0
    %289 = vmatprep.subr.mxu0 0.0
    %290 = vmatpush2.xpose.msra.mxu0 0.0
    %291 = vmatprep.subr.mxu0 0.0
    %292 = vmatpush2.xpose.msra.mxu0 0.0
    %293 = vmatprep.subr.mxu0 0.0
    %294 = vmatpush2.xpose.msra.mxu0 0.0
    %295 = vmatprep.subr.mxu0 0.0
    %296 = vmatpush2.xpose.msra.mxu0 0.0
    %297 = vmatprep.subr.mxu0 0.0
    %298 = vmatpush2.xpose.msra.mxu0 0.0
    %299 = vmatprep.subr.mxu0 0.0
    %300 = vmatpush2.xpose.msra.mxu0 0.0
    %301 = vmatprep.subr.mxu0 0.0
    %302 = vmatpush2.xpose.msra.mxu0 0.0
    %303 = vmatprep.subr.mxu0 0.0
    %304 = vmatpush2.xpose.msra.mxu0 0.0
    %305 = vmatprep.subr.mxu0 0.0
    %306 = vmatpush2.xpose.msra.mxu0 0.0
    %307 = vmatprep.subr.mxu0 0.0
    %308 = vmatpush2.xpose.msra.mxu0 0.0
    %309 = vmatprep.subr.mxu0 0.0
    %310 = vmatpush2.xpose.msra.mxu0 0.0
    %311 = vmatprep.subr.mxu0 0.0
    %312 = vmatpush2.xpose.msra.mxu0 0.0
    %313 = vmatprep.mubr.f32.mxu0 0.0
    %314 = vmatmul.mubr.f32.gmra.mxu0 %v241
    %v315 = vpop.f32.mrf.mxu0
    %v316 = vadd.f32 %v239, %v315
    %v317 = vpop.f32.mrf.mxu0
    %318 = vdwg.mxu0
    %vm319 = vcmask 122880
    %320 = vst.msk [vmem:[#allocation3] sm:$0x1] %vm319, %v316
    // Predicated region
    $region30: #{tpu_custom_call.1} parent=1 // pred_check
      _
    $region31: #{tpu_custom_call.1} parent=1 // pred_check_branch
      %322 = sbr.rel (0) target = $region33
    $region32: #{tpu_custom_call.1} parent=1 // pred_region
      %s324 = ssub.s32 16, 16
      %325 = vsyncadd [#allocation4], %s324
      %s327 = sshll.u32 [#allocation3], 4
      %s328 = int_to_ptr.vmem [resolvable:$true] %s327
      %330 = dma.vmem_to_hbm [thread:$0]  %s328, 16, %s7, [#allocation4]
    $region33: #{tpu_custom_call.1} parent=1 // pred_fallthru
      _
    // Predicated region
    $region34: #{tpu_custom_call.1} parent=1 // pred_check
      _
    $region35: #{tpu_custom_call.1} parent=1 // pred_check_branch
      %332 = sbr.rel (0) target = $region37
    $region36: #{tpu_custom_call.1} parent=1 // pred_region
      %333 = dma.done [#allocation4], 16
    $region37: #{tpu_custom_call.1} parent=1 // pred_fallthru
      _
    %334 = vsyncpa [#allocation4], 1

</llo_original>
